<compile_context>
chip_gen: v5e
topology: v5e:2x2
jax: 0.10.0
libtpu: 0.0.40
codegen_flags: <defaults>
</compile_context>

<pallas_src>
import functools

import jax
import jax.numpy as jnp
from jax.experimental import pallas as pl
from jax.experimental.pallas import tpu as pltpu

_INV_SQRT2 = 0.7071067811865476
_LANE = 128


def _gated_mlp_kernel(x_ref, w12_ref, b12_ref, w3_ref, b3_ref, o_ref, *, th):
    # x_ref:   (tm, Dp)        bf16
    # w12_ref: (1, Dp, 2*th)   bf16   (slab j of the fused/pre-swizzled w1|w2)
    # b12_ref: (1, 1, 2*th)    f32
    # w3_ref:  (th, Dp)        bf16
    # b3_ref:  (1, Dp)         f32    (resident)
    # o_ref:   (tm, Dp)        f32    (resident across j -> accumulate in place)
    j = pl.program_id(1)

    x = x_ref[...]                                             # bf16 -> MXU
    h12 = jnp.dot(x, w12_ref[0], preferred_element_type=jnp.float32) + b12_ref[0]
    h1 = h12[:, :th]
    h2 = h12[:, th:]

    # exact GELU (nn.GELU(approximate='none')) in f32 on the VPU
    g = 0.5 * h1 * (1.0 + jax.lax.erf(h1 * _INV_SQRT2))

    gated = (g * h2).astype(w3_ref.dtype)                      # bf16 for 3rd GEMM
    part = jnp.dot(gated, w3_ref[...], preferred_element_type=jnp.float32)

    @pl.when(j == 0)
    def _():
        o_ref[...] = part

    @pl.when(j > 0)
    def _():
        o_ref[...] += part

    @pl.when(j == pl.num_programs(1) - 1)
    def _():
        o_ref[...] += b3_ref[...]


def _round_up(n, m):
    return (n + m - 1) // m * m


def _pad_to(a, shape):
    pads = [(0, t - s) for s, t in zip(a.shape, shape)]
    if any(p[1] for p in pads):
        return jnp.pad(a, pads)
    return a


def _chip_config():
    """Pick (tm, th, vmem_limit, cores) per TPU generation."""
    try:
        kind = jax.devices()[0].device_kind.lower()
    except Exception:  # pragma: no cover - defensive
        kind = ""
    if ("v5 lite" in kind) or ("v5e" in kind) or ("v5litepod" in kind):
        # 197 TF/s vs ~0.82 TB/s -> tm=256 is enough; 128 MiB physical VMEM.
        return dict(tm=256, th=1024, vmem=100 * 1024 * 1024, cores=1)
    if "v6" in kind:
        # 918 TF/s vs ~1.4 TB/s -> needs a big row tile; 128 MiB physical VMEM.
        return dict(tm=1024, th=512, vmem=100 * 1024 * 1024, cores=1)
    if "v7" in kind:
        # 64 MiB physical VMEM per TC, 2 TCs -> keep limit well below 64 MiB.
        return dict(tm=512, th=512, vmem=52 * 1024 * 1024, cores=2)
    # unknown / older chips: conservative defaults
    return dict(tm=512, th=512, vmem=64 * 1024 * 1024, cores=1)


def gated_mlp_block(x, params, *, tm=None, th=None):
    """x: (..., D). params: dict of w1,b1,w2,b2,w3,b3 stored (in, out)."""
    cfg = _chip_config()
    tm = cfg["tm"] if tm is None else tm
    th = cfg["th"] if th is None else th

    w1, b1 = params["w1"], params["b1"]
    w2, b2 = params["w2"], params["b2"]
    w3, b3 = params["w3"], params["b3"]

    D, H = w1.shape
    lead = x.shape[:-1]
    x2d = x.reshape(-1, D)
    N = x2d.shape[0]

    # Lane-dense model dim (unmasked stores on the output block).
    Dp = _round_up(D, _LANE)
    # Hidden dim padded to a multiple of 128 (exact: padded contributions are 0).
    Hp = _round_up(H, _LANE)

    # Hidden tile: multiple of 128 dividing Hp.
    th = max(_LANE, min(th, Hp) // _LANE * _LANE)
    while Hp % th:
        th -= _LANE
    n_th = Hp // th

    # Row tile: big MXU-friendly tile, capped by the (8-rounded) row count, and
    # small enough that both v7x TensorCores get at least one row tile.
    tm_cap = _round_up(N, 8)
    if cfg["cores"] > 1 and N >= 2 * 256:
        per_core = _round_up(-(-N // cfg["cores"]), 256)
        tm_cap = min(tm_cap, per_core)
    tm = max(8, min(tm, tm_cap))
    Np = _round_up(N, tm)

    # ---- operand prep: bf16 matmul operands, f32 biases -------------------
    xb = _pad_to(x2d, (Np, Dp)).astype(jnp.bfloat16)

    # Fused + pre-swizzled w1|w2 slabs: (n_th, Dp, 2*th), contiguous per slab.
    w1p = _pad_to(w1, (Dp, Hp)).reshape(Dp, n_th, th).transpose(1, 0, 2)
    w2p = _pad_to(w2, (Dp, Hp)).reshape(Dp, n_th, th).transpose(1, 0, 2)
    w12 = jnp.concatenate([w1p, w2p], axis=-1).astype(jnp.bfloat16)

    b1p = _pad_to(b1, (1, Hp)).reshape(1, n_th, th).transpose(1, 0, 2)
    b2p = _pad_to(b2, (1, Hp)).reshape(1, n_th, th).transpose(1, 0, 2)
    b12 = jnp.concatenate([b1p, b2p], axis=-1).astype(jnp.float32)

    w3p = _pad_to(w3, (Hp, Dp)).astype(jnp.bfloat16)   # row slabs are contiguous
    b3p = _pad_to(b3, (1, Dp)).astype(jnp.float32)

    grid = (Np // tm, n_th)

    flops = 6 * Np * Dp * Hp                       # p1 + p2 + p3 GEMMs
    bytes_accessed = (
        xb.size * 2 + Np * Dp * 4                  # activations in / f32 out
        + grid[0] * 2 * (w12.size + w3p.size)      # streamed bf16 weights
        + grid[0] * 4 * b12.size + 4 * b3p.size
    )
    cost = pl.CostEstimate(flops=int(flops),
                           transcendentals=int(Np * Hp),
                           bytes_accessed=int(bytes_accessed))

    out2d = pl.pallas_call(
        functools.partial(_gated_mlp_kernel, th=th),
        out_shape=jax.ShapeDtypeStruct((Np, Dp), jnp.float32),
        grid_spec=pltpu.PrefetchScalarGridSpec(
            num_scalar_prefetch=0,
            grid=grid,
            in_specs=[
                pl.BlockSpec((tm, Dp), lambda i, j: (i, 0)),        # x row tile
                pl.BlockSpec((1, Dp, 2 * th), lambda i, j: (j, 0, 0)),   # w1|w2 slab
                pl.BlockSpec((1, 1, 2 * th), lambda i, j: (j, 0, 0)),    # b1|b2 slab
                pl.BlockSpec((th, Dp), lambda i, j: (j, 0)),        # w3 slab
                pl.BlockSpec((1, Dp), lambda i, j: (0, 0)),         # b3 (resident)
            ],
            out_specs=pl.BlockSpec((tm, Dp), lambda i, j: (i, 0)),  # j-invariant
        ),
        compiler_params=pltpu.CompilerParams(
            dimension_semantics=("parallel", "arbitrary"),
            vmem_limit_bytes=cfg["vmem"],
        ),
        cost_estimate=cost,
    )(xb, w12, b12, w3p, b3p)

    out = out2d[:N, :D].reshape(*lead, D)
    return out.astype(x.dtype)


def init_params(key, D, M):
    """Deterministic PyTorch-style Linear init (uniform +-1/sqrt(fan_in))."""
    H = D * M
    ks = jax.random.split(key, 6)

    def lin(kw, kb, fan_in, fan_out):
        bound = 1.0 / jnp.sqrt(fan_in)
        # stored as (in, out) so the kernel computes x @ W
        w = jax.random.uniform(kw, (fan_in, fan_out), jnp.float32, -bound, bound)
        b = jax.random.uniform(kb, (1, fan_out), jnp.float32, -bound, bound)
        return w, b

    w1, b1 = lin(ks[0], ks[1], D, H)
    w2, b2 = lin(ks[2], ks[3], D, H)
    w3, b3 = lin(ks[4], ks[5], H, D)
    return dict(w1=w1, b1=b1, w2=w2, b2=b2, w3=w3, b3=b3)


def _reference(x, p):
    # Mirrors the kernel's numeric path (bf16 MXU operands, f32 accumulation).
    bf = lambda a: a.astype(jnp.bfloat16)
    x2d = bf(x.reshape(-1, x.shape[-1]))
    h1 = jnp.dot(x2d, bf(p["w1"]), preferred_element_type=jnp.float32) + p["b1"]
    h2 = jnp.dot(x2d, bf(p["w2"]), preferred_element_type=jnp.float32) + p["b2"]
    g = 0.5 * h1 * (1.0 + jax.lax.erf(h1 * _INV_SQRT2))
    y = jnp.dot(bf(g * h2), bf(p["w3"]), preferred_element_type=jnp.float32) + p["b3"]
    return y.reshape(x.shape).astype(x.dtype)


if __name__ == "__main__":
    B, T, D, M = 2, 8, 32, 3  # hidden = D*M = 96 (pads to 128 inside the kernel)
    key = jax.random.PRNGKey(0)
    kx, kp = jax.random.split(key)
    x = jax.random.normal(kx, (B, T, D), jnp.float32)
    params = init_params(kp, D, M)

    y = gated_mlp_block(x, params)
    y = jax.block_until_ready(y)

    y_ref = _reference(x, params)
    assert y.shape == (B, T, D)
    assert jnp.allclose(y, y_ref, atol=2e-3, rtol=2e-3), "mismatch vs reference"
    print("KERNEL_OK")
</pallas_src>

<mosaic_0001>
module attributes {stable_mosaic.version = 11 : i64} {
  func.func @_gated_mlp_kernel(%arg0: i32, %arg1: i32, %arg2: memref<16x128xbf16, #tpu.memory_space<vmem>>, %arg3: memref<1x128x256xbf16, #tpu.memory_space<vmem>>, %arg4: memref<1x1x256xf32, #tpu.memory_space<vmem>>, %arg5: memref<128x128xbf16, #tpu.memory_space<vmem>>, %arg6: memref<1x128xf32, #tpu.memory_space<vmem>>, %arg7: memref<16x128xf32, #tpu.memory_space<vmem>>) attributes {dimension_semantics = [#tpu.dimension_semantics<parallel>, #tpu.dimension_semantics<arbitrary>], iteration_bounds = array<i64: 1, 1>, scalar_prefetch = 0 : i64, scratch_operands = 0 : i64, tpu.core_type = #tpu.core_type<tc>, window_params = [{transform_indices = @transform_0, window_bounds = array<i64: 16, 128>}, {transform_indices = @transform_1, window_bounds = array<i64: 1, 128, 256>}, {transform_indices = @transform_2, window_bounds = array<i64: 1, 1, 256>}, {transform_indices = @transform_3, window_bounds = array<i64: 128, 128>}, {pipeline_mode = #tpu.pipeline_mode<synchronous>, transform_indices = @transform_4, window_bounds = array<i64: 1, 128>}, {transform_indices = @transform_5, window_bounds = array<i64: 16, 128>}]} {
    %c0 = arith.constant 0 : index
    %c0_0 = arith.constant 0 : index
    %0 = vector.load %arg2[%c0, %c0_0] : memref<16x128xbf16, #tpu.memory_space<vmem>>, vector<16x128xbf16>
    %c0_1 = arith.constant 0 : index
    %c0_2 = arith.constant 0 : index
    %c0_3 = arith.constant 0 : index
    %1 = vector.load %arg3[%c0_1, %c0_2, %c0_3] : memref<1x128x256xbf16, #tpu.memory_space<vmem>>, vector<1x128x256xbf16>
    %2 = vector.shape_cast %1 : vector<1x128x256xbf16> to vector<128x256xbf16>
    %cst = arith.constant dense<0.000000e+00> : vector<16x256xf32>
    %3 = tpu.matmul %0, %2, %cst {dimension_numbers = #tpu.dot_dimension_numbers<[1], [0], [0], [1], [0, 0, 1, 1], [], []>} : vector<16x128xbf16>, vector<128x256xbf16>, vector<16x256xf32> -> vector<16x256xf32>
    %c0_4 = arith.constant 0 : index
    %c0_5 = arith.constant 0 : index
    %c0_6 = arith.constant 0 : index
    %4 = vector.load %arg4[%c0_4, %c0_5, %c0_6] : memref<1x1x256xf32, #tpu.memory_space<vmem>>, vector<1x1x256xf32>
    %5 = vector.shape_cast %4 : vector<1x1x256xf32> to vector<1x256xf32>
    %6 = vector.broadcast %5 : vector<1x256xf32> to vector<16x256xf32>
    %7 = arith.addf %3, %6 : vector<16x256xf32>
    %8 = vector.extract_strided_slice %7 {offsets = [0, 0], sizes = [16, 128], strides = [1, 1]} : vector<16x256xf32> to vector<16x128xf32>
    %9 = vector.extract_strided_slice %7 {offsets = [0, 128], sizes = [16, 128], strides = [1, 1]} : vector<16x256xf32> to vector<16x128xf32>
    %cst_7 = arith.constant 5.000000e-01 : f32
    %10 = vector.broadcast %cst_7 : f32 to vector<16x128xf32>
    %11 = arith.mulf %10, %8 : vector<16x128xf32>
    %cst_8 = arith.constant 0.707106769 : f32
    %12 = vector.broadcast %cst_8 : f32 to vector<16x128xf32>
    %13 = arith.mulf %8, %12 : vector<16x128xf32>
    %14 = math.erf %13 : vector<16x128xf32>
    %cst_9 = arith.constant 1.000000e+00 : f32
    %15 = vector.broadcast %cst_9 : f32 to vector<16x128xf32>
    %16 = arith.addf %15, %14 : vector<16x128xf32>
    %17 = arith.mulf %11, %16 : vector<16x128xf32>
    %18 = arith.mulf %17, %9 : vector<16x128xf32>
    %19 = arith.truncf %18 : vector<16x128xf32> to vector<16x128xbf16>
    %c0_10 = arith.constant 0 : index
    %c0_11 = arith.constant 0 : index
    %20 = vector.load %arg5[%c0_10, %c0_11] : memref<128x128xbf16, #tpu.memory_space<vmem>>, vector<128x128xbf16>
    %cst_12 = arith.constant dense<0.000000e+00> : vector<16x128xf32>
    %21 = tpu.matmul %19, %20, %cst_12 {dimension_numbers = #tpu.dot_dimension_numbers<[1], [0], [0], [1], [0, 0, 1, 1], [], []>} : vector<16x128xbf16>, vector<128x128xbf16>, vector<16x128xf32> -> vector<16x128xf32>
    %c0_i32 = arith.constant 0 : i32
    %22 = arith.cmpi eq, %arg1, %c0_i32 : i32
    %23 = arith.extui %22 : i1 to i32
    %c0_i32_13 = arith.constant 0 : i32
    %24 = arith.cmpi ne, %23, %c0_i32_13 : i32
    scf.if %24 {
      %c0_18 = arith.constant 0 : index
      %c0_19 = arith.constant 0 : index
      %31 = vector.load %arg7[%c0_18, %c0_19] : memref<16x128xf32, #tpu.memory_space<vmem>>, vector<16x128xf32>
      tpu.vector_store %arg7[%c0_18, %c0_19], %21 {strides = array<i32>} : memref<16x128xf32, #tpu.memory_space<vmem>>, vector<16x128xf32>,
    } else {
    }
    %c0_i32_14 = arith.constant 0 : i32
    %25 = arith.cmpi sgt, %arg1, %c0_i32_14 : i32
    %26 = arith.extui %25 : i1 to i32
    %c0_i32_15 = arith.constant 0 : i32
    %27 = arith.cmpi ne, %26, %c0_i32_15 : i32
    scf.if %27 {
      %c0_18 = arith.constant 0 : index
      %c0_19 = arith.constant 0 : index
      %31 = vector.load %arg7[%c0_18, %c0_19] : memref<16x128xf32, #tpu.memory_space<vmem>>, vector<16x128xf32>
      %32 = arith.addf %31, %21 : vector<16x128xf32>
      %c0_20 = arith.constant 0 : index
      %c0_21 = arith.constant 0 : index
      %33 = vector.load %arg7[%c0_20, %c0_21] : memref<16x128xf32, #tpu.memory_space<vmem>>, vector<16x128xf32>
      tpu.vector_store %arg7[%c0_20, %c0_21], %32 {strides = array<i32>} : memref<16x128xf32, #tpu.memory_space<vmem>>, vector<16x128xf32>,
    } else {
    }
    %c0_i32_16 = arith.constant 0 : i32
    %28 = arith.cmpi eq, %arg1, %c0_i32_16 : i32
    %29 = arith.extui %28 : i1 to i32
    %c0_i32_17 = arith.constant 0 : i32
    %30 = arith.cmpi ne, %29, %c0_i32_17 : i32
    scf.if %30 {
      %c0_18 = arith.constant 0 : index
      %c0_19 = arith.constant 0 : index
      %31 = vector.load %arg7[%c0_18, %c0_19] : memref<16x128xf32, #tpu.memory_space<vmem>>, vector<16x128xf32>
      %c0_20 = arith.constant 0 : index
      %c0_21 = arith.constant 0 : index
      %32 = vector.load %arg6[%c0_20, %c0_21] : memref<1x128xf32, #tpu.memory_space<vmem>>, vector<1x128xf32>
      %33 = vector.broadcast %32 : vector<1x128xf32> to vector<16x128xf32>
      %34 = arith.addf %31, %33 : vector<16x128xf32>
      %c0_22 = arith.constant 0 : index
      %c0_23 = arith.constant 0 : index
      %35 = vector.load %arg7[%c0_22, %c0_23] : memref<16x128xf32, #tpu.memory_space<vmem>>, vector<16x128xf32>
      tpu.vector_store %arg7[%c0_22, %c0_23], %34 {strides = array<i32>} : memref<16x128xf32, #tpu.memory_space<vmem>>, vector<16x128xf32>,
    } else {
    }
    return
  }
  func.func @transform_0(%arg0: i32, %arg1: i32) -> (i32, i32) {
    %c0_i32 = arith.constant 0 : i32
    %c0_i32_0 = arith.constant 0 : i32
    return %arg0, %c0_i32 : i32, i32
  }
  func.func @transform_1(%arg0: i32, %arg1: i32) -> (i32, i32, i32) {
    %c0_i32 = arith.constant 0 : i32
    %c0_i32_0 = arith.constant 0 : i32
    %c0_i32_1 = arith.constant 0 : i32
    return %arg1, %c0_i32, %c0_i32_0 : i32, i32, i32
  }
  func.func @transform_2(%arg0: i32, %arg1: i32) -> (i32, i32, i32) {
    %c0_i32 = arith.constant 0 : i32
    %c0_i32_0 = arith.constant 0 : i32
    %c0_i32_1 = arith.constant 0 : i32
    return %arg1, %c0_i32, %c0_i32_0 : i32, i32, i32
  }
  func.func @transform_3(%arg0: i32, %arg1: i32) -> (i32, i32) {
    %c0_i32 = arith.constant 0 : i32
    %c0_i32_0 = arith.constant 0 : i32
    return %arg1, %c0_i32 : i32, i32
  }
  func.func @transform_4(%arg0: i32, %arg1: i32) -> (i32, i32) {
    %c0_i32 = arith.constant 0 : i32
    %c0_i32_0 = arith.constant 0 : i32
    %c0_i32_1 = arith.constant 0 : i32
    return %c0_i32, %c0_i32_0 : i32, i32
  }
  func.func @transform_5(%arg0: i32, %arg1: i32) -> (i32, i32) {
    %c0_i32 = arith.constant 0 : i32
    %c0_i32_0 = arith.constant 0 : i32
    return %arg0, %c0_i32 : i32, i32
  }
}

</mosaic_0001>

<llo_original>
// kernel: tpu_custom_call.1
$region0: #{tpu_custom_call.1}
  #allocation0 [shape = 'u32[]', space=smem, size = 0x4, offset = 0x4, fixed_abs, tag = 'smem constant byte address 0x4 - core index']
  #allocation1 [shape = 'u32[72,128]{1,0:T(1,128)}', space=vmem, size = 0x9000, scoped, tag = 'internal scratch']
  %s0 = inlined_call_operand.hbm [shape: bf16[16,128], index: 0, kind: input, shape index: {}]
  %s1 = inlined_call_operand.hbm [shape: bf16[1,128,256], index: 1, kind: input, shape index: {}]
  %s2 = inlined_call_operand.hbm [shape: f32[1,1,256], index: 2, kind: input, shape index: {}]
  %s3 = inlined_call_operand.hbm [shape: bf16[128,128], index: 3, kind: input, shape index: {}]
  %s4 = inlined_call_operand.vmem [shape: f32[1,128], index: 4, kind: input, shape index: {}]
  %s5 = inlined_call_operand.hbm [shape: f32[16,128], index: 5, kind: output, shape index: {}]
  %s6 = sld [smem:[#allocation0]]
  $region58: #{tpu_custom_call.1} parent=0
    _
  %s8 = ssub.s32 1, %s6
  %s9 = scalar_select 0, %s8, %s6
  $region1: #{tpu_custom_call.1} parent=0
    #allocation2 [shape = 'u8[4096]{0}', space=vmem, size = 0x1000, scoped, tag = 'input window, operand 0, single buffered']
    #allocation3 [shape = 's32[1]{0}', space=sflag, size = 0x4, scoped, tag = 'scoped memory for tpu_custom_call.1']
    #allocation4 [shape = 's32[1]{0}', space=sflag, size = 0x4, scoped, tag = 'scoped memory for tpu_custom_call.1']
    #allocation5 [shape = 'u8[65536]{0}', space=vmem, size = 0x10000, scoped, tag = 'input window, operand 1, single buffered']
    #allocation6 [shape = 's32[1]{0}', space=sflag, size = 0x4, scoped, tag = 'scoped memory for tpu_custom_call.1']
    #allocation7 [shape = 'u8[1024]{0}', space=vmem, size = 0x400, scoped, tag = 'input window, operand 2, single buffered']
    #allocation8 [shape = 'u8[32768]{0}', space=vmem, size = 0x8000, scoped, tag = 'input window, operand 3, single buffered']
    #allocation9 [shape = 's32[1]{0}', space=sflag, size = 0x4, scoped, tag = 'scoped memory for tpu_custom_call.1']
    #allocation10 [shape = 'u8[8192]{0}', space=vmem, size = 0x2000, scoped, tag = 'output window, operand 0, single buffered']
    %10 = vsyncpa [#allocation3], 0
    %11 = vsyncpa [#allocation6], 0
    %12 = vsyncpa [#allocation9], 0
    %13 = vsyncpa [#allocation4], 0
    // Predicated region
    $region2: #{tpu_custom_call.1} parent=1 // pred_check
      _
    $region3: #{tpu_custom_call.1} parent=1 // pred_check_branch
      %15 = sbr.rel (0) target = $region5
    $region4: #{tpu_custom_call.1} parent=1 // pred_region
      %17 = vsyncadd [#allocation3], 0
      %s18 = sshll.u32 %s0, 4
      %s19 = int_to_ptr.hbm [resolvable:$true] %s18
      %s20 = sshll.u32 [#allocation2], 4
      %s21 = int_to_ptr.vmem [resolvable:$true] %s20
      %26 = dma.hbm_to_vmem [thread:$0]  %s19, 128, %s21, [#allocation3], 64, 64, 4
    $region5: #{tpu_custom_call.1} parent=1 // pred_fallthru
      _
    // Predicated region
    $region6: #{tpu_custom_call.1} parent=1 // pred_check
      _
    $region7: #{tpu_custom_call.1} parent=1 // pred_check_branch
      %28 = sbr.rel (0) target = $region9
    $region8: #{tpu_custom_call.1} parent=1 // pred_region
      %30 = vsyncadd [#allocation6], 0
      %s31 = sshll.u32 %s1, 4
      %s32 = int_to_ptr.hbm [resolvable:$true] %s31
      %s33 = sshll.u32 [#allocation5], 4
      %s34 = int_to_ptr.vmem [resolvable:$true] %s33
      %39 = dma.hbm_to_vmem [thread:$0]  %s32, 2048, %s34, [#allocation6], 128, 128, 8
    $region9: #{tpu_custom_call.1} parent=1 // pred_fallthru
      _
    // Predicated region
    $region10: #{tpu_custom_call.1} parent=1 // pred_check
      _
    $region11: #{tpu_custom_call.1} parent=1 // pred_check_branch
      %41 = sbr.rel (0) target = $region13
    $region12: #{tpu_custom_call.1} parent=1 // pred_region
      %43 = vsyncadd [#allocation6], 0
      %s45 = sshll.u32 %s2, 4
      %s46 = int_to_ptr.hbm [resolvable:$true] %s45
      %s47 = sshll.u32 [#allocation7], 4
      %s48 = int_to_ptr.vmem [resolvable:$true] %s47
      %50 = dma.hbm_to_vmem [thread:$0]  %s46, 32, %s48, [#allocation6]
    $region13: #{tpu_custom_call.1} parent=1 // pred_fallthru
      _
    // Predicated region
    $region14: #{tpu_custom_call.1} parent=1 // pred_check
      _
    $region15: #{tpu_custom_call.1} parent=1 // pred_check_branch
      %52 = sbr.rel (0) target = $region17
    $region16: #{tpu_custom_call.1} parent=1 // pred_region
      %54 = vsyncadd [#allocation9], 0
      %s55 = sshll.u32 %s3, 4
      %s56 = int_to_ptr.hbm [resolvable:$true] %s55
      %s57 = sshll.u32 [#allocation8], 4
      %s58 = int_to_ptr.vmem [resolvable:$true] %s57
      %63 = dma.hbm_to_vmem [thread:$0]  %s56, 1024, %s58, [#allocation9], 64, 64, 4
    $region17: #{tpu_custom_call.1} parent=1 // pred_fallthru
      _
    // Predicated region
    $region18: #{tpu_custom_call.1} parent=1 // pred_check
      _
    $region19: #{tpu_custom_call.1} parent=1 // pred_check_branch
      %65 = sbr.rel (0) target = $region21
    $region20: #{tpu_custom_call.1} parent=1 // pred_region
      _
    $region21: #{tpu_custom_call.1} parent=1 // pred_fallthru
      _
    // Predicated region
    $region22: #{tpu_custom_call.1} parent=1 // pred_check
      _
    $region23: #{tpu_custom_call.1} parent=1 // pred_check_branch
      %67 = sbr.rel (0) target = $region25
    $region24: #{tpu_custom_call.1} parent=1 // pred_region
      %69 = dma.done [#allocation3], 128
    $region25: #{tpu_custom_call.1} parent=1 // pred_fallthru
      _
    // Predicated region
    $region26: #{tpu_custom_call.1} parent=1 // pred_check
      _
    $region27: #{tpu_custom_call.1} parent=1 // pred_check_branch
      %71 = sbr.rel (0) target = $region29
    $region28: #{tpu_custom_call.1} parent=1 // pred_region
      %73 = dma.done [#allocation6], 2048
    $region29: #{tpu_custom_call.1} parent=1 // pred_fallthru
      _
    // Predicated region
    $region30: #{tpu_custom_call.1} parent=1 // pred_check
      _
    $region31: #{tpu_custom_call.1} parent=1 // pred_check_branch
      %75 = sbr.rel (0) target = $region33
    $region32: #{tpu_custom_call.1} parent=1 // pred_region
      %77 = dma.done [#allocation6], 32
    $region33: #{tpu_custom_call.1} parent=1 // pred_fallthru
      _
    // Predicated region
    $region34: #{tpu_custom_call.1} parent=1 // pred_check
      _
    $region35: #{tpu_custom_call.1} parent=1 // pred_check_branch
      %79 = sbr.rel (0) target = $region37
    $region36: #{tpu_custom_call.1} parent=1 // pred_region
      %81 = dma.done [#allocation9], 1024
    $region37: #{tpu_custom_call.1} parent=1 // pred_fallthru
      _
    %v82 = vld [vmem:[#allocation2] sm:$0xf]
    %v83 = vld [vmem:[#allocation2 + $0x4] sm:$0xf]
    %v84 = vld [vmem:[#allocation5] sm:$0xff]
    %v85 = vld [vmem:[#allocation5 + $0x8] sm:$0xff]
    %v86 = vld [vmem:[#allocation5 + $0x10] sm:$0xff]
    %v87 = vld [vmem:[#allocation5 + $0x18] sm:$0xff]
    %v88 = vld [vmem:[#allocation5 + $0x20] sm:$0xff]
    %v89 = vld [vmem:[#allocation5 + $0x28] sm:$0xff]
    %v90 = vld [vmem:[#allocation5 + $0x30] sm:$0xff]
    %v91 = vld [vmem:[#allocation5 + $0x38] sm:$0xff]
    %v92 = vld [vmem:[#allocation5 + $0x40] sm:$0xff]
    %v93 = vld [vmem:[#allocation5 + $0x48] sm:$0xff]
    %v94 = vld [vmem:[#allocation5 + $0x50] sm:$0xff]
    %v95 = vld [vmem:[#allocation5 + $0x58] sm:$0xff]
    %v96 = vld [vmem:[#allocation5 + $0x60] sm:$0xff]
    %v97 = vld [vmem:[#allocation5 + $0x68] sm:$0xff]
    %v98 = vld [vmem:[#allocation5 + $0x70] sm:$0xff]
    %v99 = vld [vmem:[#allocation5 + $0x78] sm:$0xff]
    %v100 = vld [vmem:[#allocation7] sm:$0x3]
    %v102 = vperm.slane %v100, 0
    %v103 = vperm.slane %v100, 1
    %v108 = vunpack.c.l.b16 %v82
    %v109 = vunpack.c.l.b16 %v83
    %v110 = vpack.c.b16 %v109, %v108
    %v128 = vunpack.c.l.b16 %v84
    %v129 = vunpack.c.h.b16 %v84
    %v130 = vunpack.c.l.b16 %v85
    %v131 = vunpack.c.h.b16 %v85
    %v132 = vunpack.c.l.b16 %v86
    %v133 = vunpack.c.h.b16 %v86
    %v134 = vunpack.c.l.b16 %v87
    %v135 = vunpack.c.h.b16 %v87
    %v136 = vunpack.c.l.b16 %v88
    %v137 = vunpack.c.h.b16 %v88
    %v138 = vunpack.c.l.b16 %v89
    %v139 = vunpack.c.h.b16 %v89
    %v140 = vunpack.c.l.b16 %v90
    %v141 = vunpack.c.h.b16 %v90
    %v142 = vunpack.c.l.b16 %v91
    %v143 = vunpack.c.h.b16 %v91
    %v144 = vunpack.c.l.b16 %v92
    %v145 = vunpack.c.h.b16 %v92
    %v146 = vunpack.c.l.b16 %v93
    %v147 = vunpack.c.h.b16 %v93
    %v148 = vunpack.c.l.b16 %v94
    %v149 = vunpack.c.h.b16 %v94
    %v150 = vunpack.c.l.b16 %v95
    %v151 = vunpack.c.h.b16 %v95
    %v152 = vunpack.c.l.b16 %v96
    %v153 = vunpack.c.h.b16 %v96
    %v154 = vunpack.c.l.b16 %v97
    %v155 = vunpack.c.h.b16 %v97
    %v156 = vunpack.c.l.b16 %v98
    %v157 = vunpack.c.h.b16 %v98
    %v158 = vunpack.c.l.b16 %v99
    %v159 = vunpack.c.h.b16 %v99
    %v160 = vpack.c.b16 %v130, %v128
    %v161 = vpack.c.b16 %v131, %v129
    %v162 = vpack.c.b16 %v134, %v132
    %v163 = vpack.c.b16 %v135, %v133
    %v164 = vpack.c.b16 %v138, %v136
    %v165 = vpack.c.b16 %v139, %v137
    %v166 = vpack.c.b16 %v142, %v140
    %v167 = vpack.c.b16 %v143, %v141
    %v168 = vpack.c.b16 %v146, %v144
    %v169 = vpack.c.b16 %v147, %v145
    %v170 = vpack.c.b16 %v150, %v148
    %v171 = vpack.c.b16 %v151, %v149
    %v172 = vpack.c.b16 %v154, %v152
    %v173 = vpack.c.b16 %v155, %v153
    %v174 = vpack.c.b16 %v158, %v156
    %v175 = vpack.c.b16 %v159, %v157
    %192 = vmatpush.bf16.msra.mxu0 %v174
    %193 = vmatpush.bf16.msra.mxu0 %v172
    %194 = vmatpush.bf16.msra.mxu0 %v170
    %195 = vmatpush.bf16.msra.mxu0 %v168
    %196 = vmatpush.bf16.msra.mxu0 %v166
    %197 = vmatpush.bf16.msra.mxu0 %v164
    %198 = vmatpush.bf16.msra.mxu0 %v162
    %199 = vmatpush.bf16.msra.mxu0 %v160
    %200 = vmatmul.bf16.gmra.mxu0 %v110
    %v201 = vpop.f32.mrf.mxu0
    %v202 = vadd.f32 %v102, %v201
    %v203 = vpop.f32.mrf.mxu0
    %v204 = vadd.f32 %v102, %v203
    %205 = vdwg.mxu0
    %206 = vmatpush.bf16.msra.mxu0 %v175
    %207 = vmatpush.bf16.msra.mxu0 %v173
    %208 = vmatpush.bf16.msra.mxu0 %v171
    %209 = vmatpush.bf16.msra.mxu0 %v169
    %210 = vmatpush.bf16.msra.mxu0 %v167
    %211 = vmatpush.bf16.msra.mxu0 %v165
    %212 = vmatpush.bf16.msra.mxu0 %v163
    %213 = vmatpush.bf16.msra.mxu0 %v161
    %214 = vmatmul.bf16.gmra.mxu0 %v110
    %v215 = vpop.f32.mrf.mxu0
    %v216 = vadd.f32 %v103, %v215
    %v217 = vpop.f32.mrf.mxu0
    %v218 = vadd.f32 %v103, %v217
    %219 = vdwg.mxu0
    %v220 = vmul.f32 %v202, 0.5
    %v221 = vmul.f32 %v204, 0.5
    %v222 = vmul.f32 %v202, 0.70710677
    %v223 = vmul.f32 %v204, 0.70710677
    %v224 = vmul.f32 %v222, %v222
    %v225 = vmin.f32 16.0, %v224
    %v226 = vmul.f32 %v225, 2.1237322e-06
    %v227 = vadd.f32 %v226, 0.00028619796
    %v228 = vmul.f32 %v225, %v227
    %v229 = vadd.f32 %v228, 0.0036580483
    %v230 = vmul.f32 %v225, %v229
    %v231 = vadd.f32 %v230, 0.05243302
    %v232 = vmul.f32 %v225, %v231
    %v233 = vadd.f32 %v232, 0.18741608
    %v234 = vmul.f32 %v225, %v233
    %v235 = vadd.f32 %v234, 1.1283791
    %v236 = vmul.f32 %v222, %v235
    %v237 = vmul.f32 %v225, 3.8918573e-05
    %v238 = vadd.f32 %v237, 0.001143296
    %v239 = vmul.f32 %v225, %v238
    %v240 = vadd.f32 %v239, 0.014752088
    %v241 = vmul.f32 %v225, %v240
    %v242 = vadd.f32 %v241, 0.112945676
    %v243 = vmul.f32 %v225, %v242
    %v244 = vadd.f32 %v243, 0.4994258
    %v245 = vmul.f32 %v225, %v244
    %v246 = vadd.f32 %v245, 1.0
    %v247 = vrcp.pop %v246
    %v248 = vmul.f32 %v246, %v247
    %v249 = vsub.f32 1.0, %v248
    %v250 = vmul.f32 %v247, %v249
    %v251 = vadd.f32 %v247, %v250
    %vm252 = vweird.f32 %v246
    %vm253 = vweird.f32 %v247
    %vm254 = vmor %vm252, %vm253
    %v255 = vsel %vm254, %v247, %v251
    %v256 = vand.u32 2147483647, %v246
    %vm257 = vcmp.eq.f32.partialorder %v256, 8.507059e+37
    %v258 = vand.u32 %v246, 2147483648
    %v259 = vor.u32 1.1754944e-38, %v258
    %v260 = vsel %vm257, %v259, %v255
    %v261 = vmul.f32 %v236, %v260
    %v262 = vmin.f32 %v261, 1.0
    %v263 = vmax.f32 %v262, -1.0
    %v264 = vmul.f32 %v223, %v223
    %v265 = vmin.f32 16.0, %v264
    %v266 = vmul.f32 %v265, 2.1237322e-06
    %v267 = vadd.f32 %v266, 0.00028619796
    %v268 = vmul.f32 %v265, %v267
    %v269 = vadd.f32 %v268, 0.0036580483
    %v270 = vmul.f32 %v265, %v269
    %v271 = vadd.f32 %v270, 0.05243302
    %v272 = vmul.f32 %v265, %v271
    %v273 = vadd.f32 %v272, 0.18741608
    %v274 = vmul.f32 %v265, %v273
    %v275 = vadd.f32 %v274, 1.1283791
    %v276 = vmul.f32 %v223, %v275
    %v277 = vmul.f32 %v265, 3.8918573e-05
    %v278 = vadd.f32 %v277, 0.001143296
    %v279 = vmul.f32 %v265, %v278
    %v280 = vadd.f32 %v279, 0.014752088
    %v281 = vmul.f32 %v265, %v280
    %v282 = vadd.f32 %v281, 0.112945676
    %v283 = vmul.f32 %v265, %v282
    %v284 = vadd.f32 %v283, 0.4994258
    %v285 = vmul.f32 %v265, %v284
    %v286 = vadd.f32 %v285, 1.0
    %v287 = vrcp.pop %v286
    %v288 = vmul.f32 %v286, %v287
    %v289 = vsub.f32 1.0, %v288
    %v290 = vmul.f32 %v287, %v289
    %v291 = vadd.f32 %v287, %v290
    %vm292 = vweird.f32 %v286
    %vm293 = vweird.f32 %v287
    %vm294 = vmor %vm292, %vm293
    %v295 = vsel %vm294, %v287, %v291
    %v296 = vand.u32 2147483647, %v286
    %vm297 = vcmp.eq.f32.partialorder %v296, 8.507059e+37
    %v298 = vand.u32 %v286, 2147483648
    %v299 = vor.u32 1.1754944e-38, %v298
    %v300 = vsel %vm297, %v299, %v295
    %v301 = vmul.f32 %v276, %v300
    %v302 = vmin.f32 %v301, 1.0
    %v303 = vmax.f32 %v302, -1.0
    %v304 = vadd.f32 %v263, 1.0
    %v305 = vadd.f32 %v303, 1.0
    %v306 = vmul.f32 %v220, %v304
    %v307 = vmul.f32 %v221, %v305
    %v308 = vmul.f32 %v306, %v216
    %v309 = vmul.f32 %v307, %v218
    %v310 = vpack.c.bf16 %v309, %v308
    %v311 = vld [vmem:[#allocation8] sm:$0xf]
    %v312 = vld [vmem:[#allocation8 + $0x4] sm:$0xf]
    %v313 = vld [vmem:[#allocation8 + $0x8] sm:$0xf]
    %v314 = vld [vmem:[#allocation8 + $0xc] sm:$0xf]
    %v315 = vld [vmem:[#allocation8 + $0x10] sm:$0xf]
    %v316 = vld [vmem:[#allocation8 + $0x14] sm:$0xf]
    %v317 = vld [vmem:[#allocation8 + $0x18] sm:$0xf]
    %v318 = vld [vmem:[#allocation8 + $0x1c] sm:$0xf]
    %v319 = vld [vmem:[#allocation8 + $0x20] sm:$0xf]
    %v320 = vld [vmem:[#allocation8 + $0x24] sm:$0xf]
    %v321 = vld [vmem:[#allocation8 + $0x28] sm:$0xf]
    %v322 = vld [vmem:[#allocation8 + $0x2c] sm:$0xf]
    %v323 = vld [vmem:[#allocation8 + $0x30] sm:$0xf]
    %v324 = vld [vmem:[#allocation8 + $0x34] sm:$0xf]
    %v325 = vld [vmem:[#allocation8 + $0x38] sm:$0xf]
    %v326 = vld [vmem:[#allocation8 + $0x3c] sm:$0xf]
    %v343 = vunpack.c.l.b16 %v311
    %v344 = vunpack.c.l.b16 %v312
    %v345 = vunpack.c.l.b16 %v313
    %v346 = vunpack.c.l.b16 %v314
    %v347 = vunpack.c.l.b16 %v315
    %v348 = vunpack.c.l.b16 %v316
    %v349 = vunpack.c.l.b16 %v317
    %v350 = vunpack.c.l.b16 %v318
    %v351 = vunpack.c.l.b16 %v319
    %v352 = vunpack.c.l.b16 %v320
    %v353 = vunpack.c.l.b16 %v321
    %v354 = vunpack.c.l.b16 %v322
    %v355 = vunpack.c.l.b16 %v323
    %v356 = vunpack.c.l.b16 %v324
    %v357 = vunpack.c.l.b16 %v325
    %v358 = vunpack.c.l.b16 %v326
    %v359 = vpack.c.b16 %v344, %v343
    %v360 = vpack.c.b16 %v346, %v345
    %v361 = vpack.c.b16 %v348, %v347
    %v362 = vpack.c.b16 %v350, %v349
    %v363 = vpack.c.b16 %v352, %v351
    %v364 = vpack.c.b16 %v354, %v353
    %v365 = vpack.c.b16 %v356, %v355
    %v366 = vpack.c.b16 %v358, %v357
    %375 = vmatpush.bf16.msra.mxu0 %v366
    %376 = vmatpush.bf16.msra.mxu0 %v365
    %377 = vmatpush.bf16.msra.mxu0 %v364
    %378 = vmatpush.bf16.msra.mxu0 %v363
    %379 = vmatpush.bf16.msra.mxu0 %v362
    %380 = vmatpush.bf16.msra.mxu0 %v361
    %381 = vmatpush.bf16.msra.mxu0 %v360
    %382 = vmatpush.bf16.msra.mxu0 %v359
    %383 = vmatmul.bf16.gmra.mxu0 %v310
    %v384 = vpop.f32.mrf.mxu0
    %v385 = vadd.f32 0.0, %v384
    %v386 = vpop.f32.mrf.mxu0
    %v387 = vadd.f32 0.0, %v386
    %388 = vdwg.mxu0
    %p389 = scmp.eq.s32.totalorder 0, 0
    // Predicated region
    $region38: #{tpu_custom_call.1} parent=1 // pred_check
      %p390 = pneg %p389
    $region39: #{tpu_custom_call.1} parent=1 // pred_check_branch
      %392 = sbr.rel (%p390) target = $region41
    $region40: #{tpu_custom_call.1} parent=1 // pred_region
      %393 = vst [vmem:[#allocation10] sm:$0xff] %v385
      %394 = vst [vmem:[#allocation10 + $0x8] sm:$0xff] %v387
    $region41: #{tpu_custom_call.1} parent=1 // pred_fallthru
      _
    %p395 = scmp.gt.s32.totalorder 0, 0
    // Predicated region
    $region42: #{tpu_custom_call.1} parent=1 // pred_check
      %p396 = pneg %p395
    $region43: #{tpu_custom_call.1} parent=1 // pred_check_branch
      %398 = sbr.rel (%p396) target = $region45
    $region44: #{tpu_custom_call.1} parent=1 // pred_region
      %v399 = vld [vmem:[#allocation10] sm:$0xff]
      %v400 = vld [vmem:[#allocation10 + $0x8] sm:$0xff]
      %v401 = vadd.f32 %v399, %v385
      %v402 = vadd.f32 %v400, %v387
      %403 = vst [vmem:[#allocation10] sm:$0xff] %v401
      %404 = vst [vmem:[#allocation10 + $0x8] sm:$0xff] %v402
    $region45: #{tpu_custom_call.1} parent=1 // pred_fallthru
      _
    // Predicated region
    $region46: #{tpu_custom_call.1} parent=1 // pred_check
      %p405 = pneg %p389
    $region47: #{tpu_custom_call.1} parent=1 // pred_check_branch
      %407 = sbr.rel (%p405) target = $region49
    $region48: #{tpu_custom_call.1} parent=1 // pred_region
      %v408 = vld [vmem:[#allocation10] sm:$0xff]
      %v409 = vld [vmem:[#allocation10 + $0x8] sm:$0xff]
      %v410 = vld [vmem:[%s4] sm:$0x1]
      %v412 = vperm.slane %v410, 0
      %v414 = vadd.f32 %v408, %v412
      %v415 = vadd.f32 %v409, %v412
      %416 = vst [vmem:[#allocation10] sm:$0xff] %v414
      %417 = vst [vmem:[#allocation10 + $0x8] sm:$0xff] %v415
    $region49: #{tpu_custom_call.1} parent=1 // pred_fallthru
      _
    // Predicated region
    $region50: #{tpu_custom_call.1} parent=1 // pred_check
      _
    $region51: #{tpu_custom_call.1} parent=1 // pred_check_branch
      %419 = sbr.rel (0) target = $region53
    $region52: #{tpu_custom_call.1} parent=1 // pred_region
      %421 = vsyncadd [#allocation4], 0
      %s422 = sshll.u32 [#allocation10], 4
      %s423 = int_to_ptr.vmem [resolvable:$true] %s422
      %s424 = sshll.u32 %s5, 4
      %s425 = int_to_ptr.hbm [resolvable:$true] %s424
      %430 = dma.vmem_to_hbm [thread:$0]  %s423, 256, %s425, [#allocation4], 128, 128, 8
    $region53: #{tpu_custom_call.1} parent=1 // pred_fallthru
      _
    // Predicated region
    $region54: #{tpu_custom_call.1} parent=1 // pred_check
      _
    $region55: #{tpu_custom_call.1} parent=1 // pred_check_branch
      %432 = sbr.rel (0) target = $region57
    $region56: #{tpu_custom_call.1} parent=1 // pred_region
      %434 = dma.done [#allocation4], 256
    $region57: #{tpu_custom_call.1} parent=1 // pred_fallthru
      _
    %435 = vsyncpa [#allocation3], 1
    %436 = vsyncpa [#allocation6], 1
    %437 = vsyncpa [#allocation9], 1
    %438 = vsyncpa [#allocation4], 1

</llo_original>
